<compile_context>
chip_gen: v6e
topology: v6e:2x2x1
jax: 0.10.0
libtpu: 0.0.40
codegen_flags: <defaults>
</compile_context>

<pallas_src>
import jax
import jax.numpy as jnp
from jax.experimental import pallas as pl
from jax.experimental.pallas import tpu as pltpu

# ----------------------------- model dims -----------------------------------
B = 2        # batch
S = 8        # sequence length
D_MODEL = 32
D_FF = 64


# --------------------------- Pallas kernel -----------------------------------

def ffn_kernel(x_ref, w1b1_ref, w2b2_ref, o_ref):
    """Fused Linear -> ReLU -> Linear over all rows in one grid step.

    x_ref    : (N, D_MODEL)          flattened (batch*seq, d_model), f32
    w1b1_ref : (D_MODEL + 1, D_FF)   rows [0:D_MODEL] = W1, row D_MODEL = b1
    w2b2_ref : (D_FF + 1, D_MODEL)   rows [0:D_FF]    = W2, row D_FF    = b2
    o_ref    : (N, D_MODEL)
    """
    x = x_ref[...]                                   # already f32 — no cast

    # Static, sublane-aligned (offsets 0/32/64 are multiples of 8) slices of
    # the packed parameter buffers.
    w1 = w1b1_ref[0:D_MODEL, :]                      # (D_MODEL, D_FF)
    b1 = w1b1_ref[D_MODEL:D_MODEL + 1, :]            # (1, D_FF)
    w2 = w2b2_ref[0:D_FF, :]                         # (D_FF, D_MODEL)
    b2 = w2b2_ref[D_FF:D_FF + 1, :]                  # (1, D_MODEL)

    # Linear 1 + ReLU  (dropout is identity in eval mode).
    h = jnp.dot(x, w1, preferred_element_type=jnp.float32) + b1
    h = jnp.maximum(h, 0.0)

    # Linear 2.
    y = jnp.dot(h, w2, preferred_element_type=jnp.float32) + b2

    o_ref[...] = y.astype(o_ref.dtype)


# ------------------------------ wrapper ---------------------------------------

def positionwise_feed_forward(x, w1b1, w2b2):
    """x: (..., d_model) -> (..., d_model).  Single fused pallas_call.

    w1b1 = concat([W1, b1[None] if needed], axis=0)  : (d_model+1, d_ff)
    w2b2 = concat([W2, b2], axis=0)                  : (d_ff+1, d_model)
    """
    orig_shape = x.shape
    d_model = orig_shape[-1]
    n = 1
    for s in orig_shape[:-1]:
        n *= s
    x2 = x.reshape(n, d_model)                 # free (contiguous) reshape in XLA

    d_ff = w1b1.shape[1]
    itemsize = jnp.dtype(x.dtype).itemsize
    # 2 matmuls, 2*M*K*N flops each.
    flops = 2 * n * d_model * d_ff + 2 * n * d_ff * d_model
    bytes_accessed = (x2.size + w1b1.size + w2b2.size + n * d_model) * itemsize

    vmem = pl.BlockSpec(memory_space=pltpu.MemorySpace.VMEM)
    out = pl.pallas_call(
        ffn_kernel,
        out_shape=jax.ShapeDtypeStruct((n, d_model), x.dtype),
        in_specs=[vmem, vmem, vmem],
        out_specs=vmem,
        cost_estimate=pl.CostEstimate(
            flops=flops, transcendentals=0, bytes_accessed=bytes_accessed),
    )(x2, w1b1, w2b2)

    return out.reshape(orig_shape)


# ------------------------------- params ---------------------------------------

def init_params(key):
    k1, k2, k3, k4 = jax.random.split(key, 4)
    scl = 0.1
    w1 = jax.random.normal(k1, (D_MODEL, D_FF), jnp.float32) * scl
    b1 = jax.random.normal(k2, (1, D_FF), jnp.float32) * scl
    w2 = jax.random.normal(k3, (D_FF, D_MODEL), jnp.float32) * scl
    b2 = jax.random.normal(k4, (1, D_MODEL), jnp.float32) * scl
    return {
        "w1": w1, "b1": b1, "w2": w2, "b2": b2,
        # Pack biases as an extra trailing row of each weight matrix ONCE at
        # init time -> 3 input DMA descriptors per call instead of 5.
        "w1b1": jnp.concatenate([w1, b1], axis=0),   # (D_MODEL+1, D_FF)
        "w2b2": jnp.concatenate([w2, b2], axis=0),   # (D_FF+1, D_MODEL)
    }


def reference_ffn(x, p):
    """Pure-JAX reference: w2(relu(w1(x))) with eval-mode dropout (identity)."""
    h = jnp.maximum(x @ p["w1"] + p["b1"], 0.0)
    return h @ p["w2"] + p["b2"]


# -------------------------------- main -----------------------------------------

if __name__ == "__main__":
    key = jax.random.PRNGKey(0)
    kx, kp = jax.random.split(key, 2)

    x = jax.random.normal(kx, (B, S, D_MODEL), jnp.float32)
    params = init_params(kp)

    # TODO(synk): training-mode dropout (random mask) is not implemented; the
    # kernel matches the module in eval mode only.
    out = positionwise_feed_forward(x, params["w1b1"], params["w2b2"])
    jax.block_until_ready(out)

    assert out.shape == (B, S, D_MODEL)
    ref = reference_ffn(x, params)
    assert jnp.allclose(out, ref, atol=1e-5, rtol=1e-5)

    print("KERNEL_OK")
</pallas_src>

<mosaic_0001>
module attributes {stable_mosaic.version = 11 : i64} {
  func.func @ffn_kernel(%arg0: memref<16x32xf32, #tpu.memory_space<vmem>>, %arg1: memref<33x64xf32, #tpu.memory_space<vmem>>, %arg2: memref<65x32xf32, #tpu.memory_space<vmem>>, %arg3: memref<16x32xf32, #tpu.memory_space<vmem>>) attributes {dimension_semantics = [], scalar_prefetch = 0 : i64, scratch_operands = 0 : i64, tpu.core_type = #tpu.core_type<tc>} {
    %c0 = arith.constant 0 : index
    %c0_0 = arith.constant 0 : index
    %0 = vector.load %arg0[%c0, %c0_0] : memref<16x32xf32, #tpu.memory_space<vmem>>, vector<16x32xf32>
    %c0_1 = arith.constant 0 : index
    %c0_2 = arith.constant 0 : index
    %1 = vector.load %arg1[%c0_1, %c0_2] : memref<33x64xf32, #tpu.memory_space<vmem>>, vector<32x64xf32>
    %c32 = arith.constant 32 : index
    %c0_3 = arith.constant 0 : index
    %2 = vector.load %arg1[%c32, %c0_3] : memref<33x64xf32, #tpu.memory_space<vmem>>, vector<1x64xf32>
    %c0_4 = arith.constant 0 : index
    %c0_5 = arith.constant 0 : index
    %3 = vector.load %arg2[%c0_4, %c0_5] : memref<65x32xf32, #tpu.memory_space<vmem>>, vector<64x32xf32>
    %c64 = arith.constant 64 : index
    %c0_6 = arith.constant 0 : index
    %4 = vector.load %arg2[%c64, %c0_6] : memref<65x32xf32, #tpu.memory_space<vmem>>, vector<1x32xf32>
    %cst = arith.constant dense<0.000000e+00> : vector<16x64xf32>
    %5 = tpu.matmul %0, %1, %cst {dimension_numbers = #tpu.dot_dimension_numbers<[1], [0], [0], [1], [0, 0, 1, 1], [], []>} : vector<16x32xf32>, vector<32x64xf32>, vector<16x64xf32> -> vector<16x64xf32>
    %6 = vector.broadcast %2 : vector<1x64xf32> to vector<16x64xf32>
    %7 = arith.addf %5, %6 : vector<16x64xf32>
    %cst_7 = arith.constant 0.000000e+00 : f32
    %8 = vector.broadcast %cst_7 : f32 to vector<16x64xf32>
    %9 = arith.maximumf %7, %8 : vector<16x64xf32>
    %cst_8 = arith.constant dense<0.000000e+00> : vector<16x32xf32>
    %10 = tpu.matmul %9, %3, %cst_8 {dimension_numbers = #tpu.dot_dimension_numbers<[1], [0], [0], [1], [0, 0, 1, 1], [], []>} : vector<16x64xf32>, vector<64x32xf32>, vector<16x32xf32> -> vector<16x32xf32>
    %11 = vector.broadcast %4 : vector<1x32xf32> to vector<16x32xf32>
    %12 = arith.addf %10, %11 : vector<16x32xf32>
    %c0_9 = arith.constant 0 : index
    %c0_10 = arith.constant 0 : index
    %13 = vector.load %arg3[%c0_9, %c0_10] : memref<16x32xf32, #tpu.memory_space<vmem>>, vector<16x32xf32>
    tpu.vector_store %arg3[%c0_9, %c0_10], %12 {strides = array<i32>} : memref<16x32xf32, #tpu.memory_space<vmem>>, vector<16x32xf32>,
    return
  }
}

</mosaic_0001>

<llo_original>
// kernel: tpu_custom_call.1
$region0: #{tpu_custom_call.1}
  #allocation0 [shape = 'u32[]', space=smem, size = 0x4, offset = 0x4, fixed_abs, tag = 'smem constant byte address 0x4 - core index']
  #allocation1 [shape = 'u32[144,128]{1,0:T(1,128)}', space=vmem, size = 0x12000, scoped, tag = 'internal scratch']
  %s0 = inlined_call_operand.vmem [shape: f32[16,32], index: 0, kind: input, shape index: {}]
  %s1 = inlined_call_operand.vmem [shape: f32[33,64], index: 1, kind: input, shape index: {}]
  %s2 = inlined_call_operand.vmem [shape: f32[65,32], index: 2, kind: input, shape index: {}]
  %s3 = inlined_call_operand.hbm [shape: f32[16,32], index: 3, kind: output, shape index: {}]
  %s4 = sld [smem:[#allocation0]]
  $region22: #{tpu_custom_call.1} parent=0
    _
  %s6 = ssub.s32 1, %s4
  %s7 = scalar_select 0, %s6, %s4
  $region1: #{tpu_custom_call.1} parent=0
    #allocation2 [shape = 'u8[8192]{0}', space=vmem, size = 0x2000, scoped, tag = 'output window, operand 0, single buffered']
    #allocation3 [shape = 's32[1]{0}', space=sflag, size = 0x4, scoped, tag = 'scoped memory for tpu_custom_call.1']
    %8 = vsyncpa [#allocation3], 0
    // Predicated region
    $region2: #{tpu_custom_call.1} parent=1 // pred_check
      _
    $region3: #{tpu_custom_call.1} parent=1 // pred_check_branch
      %10 = sbr.rel (0) target = $region5
    $region4: #{tpu_custom_call.1} parent=1 // pred_region
      _
    $region5: #{tpu_custom_call.1} parent=1 // pred_fallthru
      _
    // Predicated region
    $region6: #{tpu_custom_call.1} parent=1 // pred_check
      _
    $region7: #{tpu_custom_call.1} parent=1 // pred_check_branch
      %12 = sbr.rel (0) target = $region9
    $region8: #{tpu_custom_call.1} parent=1 // pred_region
      _
    $region9: #{tpu_custom_call.1} parent=1 // pred_fallthru
      _
    // Predicated region
    $region10: #{tpu_custom_call.1} parent=1 // pred_check
      _
    $region11: #{tpu_custom_call.1} parent=1 // pred_check_branch
      %14 = sbr.rel (0) target = $region13
    $region12: #{tpu_custom_call.1} parent=1 // pred_region
      _
    $region13: #{tpu_custom_call.1} parent=1 // pred_fallthru
      _
    %v15 = vld [vmem:[%s0] sm:$0xff]
    %v16 = vld [vmem:[%s0 + $0x8] sm:$0xff]
    %v17 = vld [vmem:[%s1] sm:$0xff]
    %v18 = vld [vmem:[%s1 + $0x8] sm:$0xff]
    %v19 = vld [vmem:[%s1 + $0x10] sm:$0xff]
    %v20 = vld [vmem:[%s1 + $0x18] sm:$0xff]
    %v21 = vld [vmem:[%s1 + $0x20] sm:$0x1]
    %v22 = vld [vmem:[%s2] sm:$0xff]
    %v23 = vld [vmem:[%s2 + $0x8] sm:$0xff]
    %v24 = vld [vmem:[%s2 + $0x10] sm:$0xff]
    %v25 = vld [vmem:[%s2 + $0x18] sm:$0xff]
    %v26 = vld [vmem:[%s2 + $0x20] sm:$0xff]
    %v27 = vld [vmem:[%s2 + $0x28] sm:$0xff]
    %v28 = vld [vmem:[%s2 + $0x30] sm:$0xff]
    %v29 = vld [vmem:[%s2 + $0x38] sm:$0xff]
    %v30 = vld [vmem:[%s2 + $0x40] sm:$0x1]
    %v31 = vlaneseq
    %v32 = vshrl.u32 %v31, 7
    %v33 = vsub.s32 0, %v32
    %v34 = vrot.slane %v21, %v33
    %vm35 = vcmask 261120
    %v37 = vsel %vm35, %v15, 0
    %v40 = vsel %vm35, %v16, 0
    %42 = vmatprep.subr.mxu0 0.0
    %43 = vmatpush1.msra.mxu0 0.0
    %44 = vmatprep.subr.mxu0 0.0
    %45 = vmatpush1.msra.mxu0 0.0
    %46 = vmatprep.subr.mxu0 0.0
    %47 = vmatpush1.msra.mxu0 0.0
    %48 = vmatprep.subr.mxu0 0.0
    %49 = vmatpush1.msra.mxu0 0.0
    %50 = vmatprep.subr.mxu0 0.0
    %51 = vmatpush1.msra.mxu0 0.0
    %52 = vmatprep.subr.mxu0 0.0
    %53 = vmatpush1.msra.mxu0 0.0
    %54 = vmatprep.subr.mxu0 0.0
    %55 = vmatpush1.msra.mxu0 0.0
    %56 = vmatprep.subr.mxu0 0.0
    %57 = vmatpush1.msra.mxu0 0.0
    %58 = vmatprep.subr.mxu0 0.0
    %59 = vmatpush1.msra.mxu0 0.0
    %60 = vmatprep.subr.mxu0 0.0
    %61 = vmatpush1.msra.mxu0 0.0
    %62 = vmatprep.subr.mxu0 0.0
    %63 = vmatpush1.msra.mxu0 0.0
    %64 = vmatprep.subr.mxu0 0.0
    %65 = vmatpush1.msra.mxu0 0.0
    %66 = vmatprep.subr.mxu0 0.0
    %67 = vmatpush1.msra.mxu0 %v20
    %68 = vmatprep.subr.mxu0 0.0
    %69 = vmatpush1.msra.mxu0 %v19
    %70 = vmatprep.subr.mxu0 0.0
    %71 = vmatpush1.msra.mxu0 %v18
    %72 = vmatprep.subr.mxu0 0.0
    %73 = vmatpush1.msra.mxu0 %v17
    %74 = vmatprep.subr.mxu0 0.0
    %75 = vmatpush2.msra.mxu0 0.0
    %76 = vmatprep.subr.mxu0 0.0
    %77 = vmatpush2.msra.mxu0 0.0
    %78 = vmatprep.subr.mxu0 0.0
    %79 = vmatpush2.msra.mxu0 0.0
    %80 = vmatprep.subr.mxu0 0.0
    %81 = vmatpush2.msra.mxu0 0.0
    %82 = vmatprep.subr.mxu0 0.0
    %83 = vmatpush2.msra.mxu0 0.0
    %84 = vmatprep.subr.mxu0 0.0
    %85 = vmatpush2.msra.mxu0 0.0
    %86 = vmatprep.subr.mxu0 0.0
    %87 = vmatpush2.msra.mxu0 0.0
    %88 = vmatprep.subr.mxu0 0.0
    %89 = vmatpush2.msra.mxu0 0.0
    %90 = vmatprep.subr.mxu0 0.0
    %91 = vmatpush2.msra.mxu0 0.0
    %92 = vmatprep.subr.mxu0 0.0
    %93 = vmatpush2.msra.mxu0 0.0
    %94 = vmatprep.subr.mxu0 0.0
    %95 = vmatpush2.msra.mxu0 0.0
    %96 = vmatprep.subr.mxu0 0.0
    %97 = vmatpush2.msra.mxu0 0.0
    %98 = vmatprep.subr.mxu0 0.0
    %99 = vmatpush2.msra.mxu0 0.0
    %100 = vmatprep.subr.mxu0 0.0
    %101 = vmatpush2.msra.mxu0 0.0
    %102 = vmatprep.subr.mxu0 0.0
    %103 = vmatpush2.msra.mxu0 0.0
    %104 = vmatprep.subr.mxu0 0.0
    %105 = vmatpush2.msra.mxu0 0.0
    %106 = vmatprep.mubr.f32.mxu0 0.0
    %107 = vmatmul.mubr.f32.gmra.mxu0 %v37
    %v108 = vpop.f32.mrf.mxu0
    %v109 = vadd.f32 %v34, %v108
    %v110 = vpop.f32.mrf.mxu0
    %111 = vmatprep.mubr.f32.mxu0 0.0
    %112 = vmatmul.mubr.f32.gmra.mxu0 %v40
    %v113 = vpop.f32.mrf.mxu0
    %v114 = vadd.f32 %v34, %v113
    %v115 = vpop.f32.mrf.mxu0
    %116 = vdwg.mxu0
    %v117 = vmax.f32 %v109, 0.0
    %v118 = vmax.f32 %v114, 0.0
    %v119 = vlaneseq
    %v120 = vshrl.u32 %v119, 7
    %v121 = vsub.s32 0, %v120
    %v122 = vrot.slane %v30, %v121
    %vm123 = vcmask 523264
    %v125 = vsel %vm123, %v117, 0
    %v128 = vsel %vm123, %v118, 0
    %130 = vmatprep.subr.mxu0 0.0
    %131 = vmatpush1.msra.mxu0 0.0
    %132 = vmatprep.subr.mxu0 0.0
    %133 = vmatpush1.msra.mxu0 0.0
    %134 = vmatprep.subr.mxu0 0.0
    %135 = vmatpush1.msra.mxu0 0.0
    %136 = vmatprep.subr.mxu0 0.0
    %137 = vmatpush1.msra.mxu0 0.0
    %138 = vmatprep.subr.mxu0 0.0
    %139 = vmatpush1.msra.mxu0 0.0
    %140 = vmatprep.subr.mxu0 0.0
    %141 = vmatpush1.msra.mxu0 0.0
    %142 = vmatprep.subr.mxu0 0.0
    %143 = vmatpush1.msra.mxu0 0.0
    %144 = vmatprep.subr.mxu0 0.0
    %145 = vmatpush1.msra.mxu0 0.0
    %146 = vmatprep.subr.mxu0 0.0
    %147 = vmatpush1.msra.mxu0 %v29
    %148 = vmatprep.subr.mxu0 0.0
    %149 = vmatpush1.msra.mxu0 %v28
    %150 = vmatprep.subr.mxu0 0.0
    %151 = vmatpush1.msra.mxu0 %v27
    %152 = vmatprep.subr.mxu0 0.0
    %153 = vmatpush1.msra.mxu0 %v26
    %154 = vmatprep.subr.mxu0 0.0
    %155 = vmatpush1.msra.mxu0 %v25
    %156 = vmatprep.subr.mxu0 0.0
    %157 = vmatpush1.msra.mxu0 %v24
    %158 = vmatprep.subr.mxu0 0.0
    %159 = vmatpush1.msra.mxu0 %v23
    %160 = vmatprep.subr.mxu0 0.0
    %161 = vmatpush1.msra.mxu0 %v22
    %162 = vmatprep.subr.mxu0 0.0
    %163 = vmatpush2.msra.mxu0 0.0
    %164 = vmatprep.subr.mxu0 0.0
    %165 = vmatpush2.msra.mxu0 0.0
    %166 = vmatprep.subr.mxu0 0.0
    %167 = vmatpush2.msra.mxu0 0.0
    %168 = vmatprep.subr.mxu0 0.0
    %169 = vmatpush2.msra.mxu0 0.0
    %170 = vmatprep.subr.mxu0 0.0
    %171 = vmatpush2.msra.mxu0 0.0
    %172 = vmatprep.subr.mxu0 0.0
    %173 = vmatpush2.msra.mxu0 0.0
    %174 = vmatprep.subr.mxu0 0.0
    %175 = vmatpush2.msra.mxu0 0.0
    %176 = vmatprep.subr.mxu0 0.0
    %177 = vmatpush2.msra.mxu0 0.0
    %178 = vmatprep.subr.mxu0 0.0
    %179 = vmatpush2.msra.mxu0 0.0
    %180 = vmatprep.subr.mxu0 0.0
    %181 = vmatpush2.msra.mxu0 0.0
    %182 = vmatprep.subr.mxu0 0.0
    %183 = vmatpush2.msra.mxu0 0.0
    %184 = vmatprep.subr.mxu0 0.0
    %185 = vmatpush2.msra.mxu0 0.0
    %186 = vmatprep.subr.mxu0 0.0
    %187 = vmatpush2.msra.mxu0 0.0
    %188 = vmatprep.subr.mxu0 0.0
    %189 = vmatpush2.msra.mxu0 0.0
    %190 = vmatprep.subr.mxu0 0.0
    %191 = vmatpush2.msra.mxu0 0.0
    %192 = vmatprep.subr.mxu0 0.0
    %193 = vmatpush2.msra.mxu0 0.0
    %194 = vmatprep.mubr.f32.mxu0 0.0
    %195 = vmatmul.mubr.f32.gmra.mxu0 %v125
    %v196 = vpop.f32.mrf.mxu0
    %v197 = vadd.f32 %v122, %v196
    %v198 = vpop.f32.mrf.mxu0
    %199 = vmatprep.mubr.f32.mxu0 0.0
    %200 = vmatmul.mubr.f32.gmra.mxu0 %v128
    %v201 = vpop.f32.mrf.mxu0
    %v202 = vadd.f32 %v122, %v201
    %v203 = vpop.f32.mrf.mxu0
    %204 = vdwg.mxu0
    %205 = vst.msk [vmem:[#allocation2] sm:$0xff] %vm35, %v197
    %206 = vst.msk [vmem:[#allocation2 + $0x8] sm:$0xff] %vm35, %v202
    // Predicated region
    $region14: #{tpu_custom_call.1} parent=1 // pred_check
      _
    $region15: #{tpu_custom_call.1} parent=1 // pred_check_branch
      %208 = sbr.rel (0) target = $region17
    $region16: #{tpu_custom_call.1} parent=1 // pred_region
      %s210 = ssub.s32 256, 256
      %211 = vsyncadd [#allocation3], %s210
      %s212 = sshll.u32 [#allocation2], 4
      %s213 = int_to_ptr.vmem [resolvable:$true] %s212
      %218 = dma.vmem_to_hbm [thread:$0]  %s213, 256, %s3, [#allocation3], 128, 128, 8
    $region17: #{tpu_custom_call.1} parent=1 // pred_fallthru
      _
    // Predicated region
    $region18: #{tpu_custom_call.1} parent=1 // pred_check
      _
    $region19: #{tpu_custom_call.1} parent=1 // pred_check_branch
      %220 = sbr.rel (0) target = $region21
    $region20: #{tpu_custom_call.1} parent=1 // pred_region
      %221 = dma.done [#allocation3], 256
    $region21: #{tpu_custom_call.1} parent=1 // pred_fallthru
      _
    %222 = vsyncpa [#allocation3], 1

</llo_original>
